<compile_context>
chip_gen: v7x
topology: tpu7x:2x2x1
jax: 0.10.0
libtpu: 0.0.40
codegen_flags: <defaults>
</compile_context>

<pallas_src>
import functools

import jax
import jax.numpy as jnp
from jax.experimental import pallas as pl
from jax.experimental.pallas import tpu as pltpu


def _round_up(x: int, m: int) -> int:
    return ((x + m - 1) // m) * m


@functools.lru_cache(maxsize=None)
def _vmem_limit_bytes() -> int:
    # Query the chip if possible; otherwise assume the smallest VMEM (v7x: 64 MiB).
    try:
        cap = int(pltpu.get_tpu_info().vmem_capacity_bytes)
    except Exception:
        cap = 64 << 20
    # Above v5e's 16 MiB scoped default, <= half of physical on every generation.
    return min(cap // 2, 48 << 20)


def _tile_budget_bytes() -> int:
    # Double-buffered input + output => ~4 live buffers per grid step.
    return _vmem_limit_bytes() // 2


def _largest_dividing_tile(total: int, cap: int, quantum: int = 128) -> int:
    """Largest multiple of `quantum` that divides `total` and is <= cap.
    Assumes total % quantum == 0 (so `quantum` itself always works)."""
    t = min(total, max(quantum, (cap // quantum) * quantum))
    t = max(quantum, (t // quantum) * quantum)
    while t > quantum and total % t != 0:
        t -= quantum
    return t


# --------------------------------------------------------------------------
# Kernels
# --------------------------------------------------------------------------
def _pixel_norm_lane_reduce_kernel(x_ref, o_ref, *, inv_d):
    # x_ref / o_ref: (TR, D_pad) tile; reduce over the lane (last) axis.
    # Padded lanes are zero, so the sum is exact; divide by the TRUE D.
    x = x_ref[...].astype(jnp.float32)
    sum_sq = jnp.sum(x * x, axis=-1, keepdims=True)
    inv_norm = jax.lax.rsqrt(sum_sq * inv_d + 1e-8)
    o_ref[...] = (x * inv_norm).astype(o_ref.dtype)


def _pixel_norm_sublane_reduce_kernel(x_ref, o_ref):
    # x_ref / o_ref: (1, C, T) tile; reduce over the channel (sublane) axis.
    # Each lane column is one spatial position, normalized independently,
    # so zero-padding along H*W is harmless (sliced off in the wrapper).
    x = x_ref[...].astype(jnp.float32)
    mean_sq = jnp.mean(x * x, axis=1, keepdims=True)
    inv_norm = jax.lax.rsqrt(mean_sq + 1e-8)
    o_ref[...] = (x * inv_norm).astype(o_ref.dtype)


# --------------------------------------------------------------------------
# 2-D path: (N, D) latent vectors, reduce over D (lanes)
# --------------------------------------------------------------------------
def _pixel_norm_2d(x2d):
    rows, feat = x2d.shape
    dtype_bytes = x2d.dtype.itemsize
    feat_pad = _round_up(feat, 128)

    # Row tile: as large as the VMEM budget allows (preferred 1024), multiple of 8.
    max_tr = max(8, _tile_budget_bytes() // (4 * feat_pad * dtype_bytes))
    tr = 1024
    while tr > 8 and tr > max_tr:
        tr //= 2
    tr = _round_up(min(tr, _round_up(rows, 8)), 8)

    rows_pad = _round_up(rows, tr)
    grid = rows_pad // tr
    # v7x has 2 TensorCores: prefer >= 2 grid steps when the input allows it.
    if grid == 1 and tr >= 16:
        tr_half = _round_up(tr // 2, 8)
        rows_pad_half = _round_up(rows, tr_half)
        if rows_pad_half // tr_half >= 2:
            tr, rows_pad, grid = tr_half, rows_pad_half, rows_pad_half // tr_half

    xp = x2d
    if rows_pad != rows or feat_pad != feat:
        xp = jnp.pad(x2d, ((0, rows_pad - rows), (0, feat_pad - feat)))

    kernel = functools.partial(_pixel_norm_lane_reduce_kernel, inv_d=1.0 / feat)
    out = pl.pallas_call(
        kernel,
        out_shape=jax.ShapeDtypeStruct((rows_pad, feat_pad), x2d.dtype),
        grid_spec=pltpu.PrefetchScalarGridSpec(
            num_scalar_prefetch=0,
            grid=(grid,),
            in_specs=[pl.BlockSpec((tr, feat_pad), lambda i: (i, 0))],
            out_specs=pl.BlockSpec((tr, feat_pad), lambda i: (i, 0)),
        ),
        compiler_params=pltpu.CompilerParams(
            dimension_semantics=("parallel",),
            vmem_limit_bytes=_vmem_limit_bytes(),
        ),
    )(xp)

    if rows_pad != rows or feat_pad != feat:
        out = out[:rows, :feat]
    return out


# --------------------------------------------------------------------------
# 4-D path: (N, C, H, W), reduce over C (sublanes) on a contiguous (N, C, H*W) view
# --------------------------------------------------------------------------
def _pixel_norm_nchw(x):
    n, c, h, w = x.shape
    hw = h * w
    dtype_bytes = x.dtype.itemsize

    x3 = x.reshape(n, c, hw)  # contiguous reshape, no transpose / extra HBM pass
    hw_pad = _round_up(hw, 128)
    if hw_pad != hw:
        x3 = jnp.pad(x3, ((0, 0), (0, 0), (0, hw_pad - hw)))

    # Lane tile over H*W: multiple of 128, divides hw_pad, within the VMEM budget.
    # VMEM sublane padding rounds C up to 8, so budget with round_up(c, 8).
    cap = max(128, _tile_budget_bytes() // (4 * _round_up(c, 8) * dtype_bytes))
    t = _largest_dividing_tile(hw_pad, cap)
    # v7x: make sure both TensorCores get at least one grid step.
    if n * (hw_pad // t) < 2 and hw_pad > 128:
        t = _largest_dividing_tile(hw_pad, max(128, hw_pad // 2))

    grid = (n, hw_pad // t)
    out = pl.pallas_call(
        _pixel_norm_sublane_reduce_kernel,
        out_shape=jax.ShapeDtypeStruct((n, c, hw_pad), x.dtype),
        grid_spec=pltpu.PrefetchScalarGridSpec(
            num_scalar_prefetch=0,
            grid=grid,
            in_specs=[pl.BlockSpec((1, c, t), lambda i, j: (i, 0, j))],
            out_specs=pl.BlockSpec((1, c, t), lambda i, j: (i, 0, j)),
        ),
        compiler_params=pltpu.CompilerParams(
            dimension_semantics=("parallel", "parallel"),
            vmem_limit_bytes=_vmem_limit_bytes(),
        ),
    )(x3)

    if hw_pad != hw:
        out = out[:, :, :hw]
    return out.reshape(n, c, h, w)


@jax.jit
def pixen_norm(x):
    """Pallas implementation of Pixen_Norm.forward (normalize over dim=1)."""
    if x.ndim == 2:
        return _pixel_norm_2d(x)
    elif x.ndim == 4:
        return _pixel_norm_nchw(x)
    else:
        raise ValueError(f"Unsupported rank {x.ndim}; expected 2 or 4.")


def _reference(x):
    mean_sq = jnp.mean(x.astype(jnp.float32) ** 2, axis=1, keepdims=True)
    return (x / jnp.sqrt(mean_sq + 1e-8)).astype(x.dtype)


if __name__ == "__main__":
    key = jax.random.PRNGKey(0)
    k1, k2 = jax.random.split(key)

    # 4-D NCHW conv-style input (PyTorch dim=1 channel reduction).
    x_nchw = jax.random.normal(k1, (2, 4, 16, 16), dtype=jnp.float32)
    # 2-D latent-vector input as used in the StyleGAN mapping network.
    x_lat = jax.random.normal(k2, (2, 32), dtype=jnp.float32)

    y_nchw = jax.block_until_ready(pixen_norm(x_nchw))
    y_lat = jax.block_until_ready(pixen_norm(x_lat))

    ok = (
        y_nchw.shape == x_nchw.shape
        and y_lat.shape == x_lat.shape
        and jnp.allclose(y_nchw, _reference(x_nchw), atol=1e-5, rtol=1e-5)
        and jnp.allclose(y_lat, _reference(x_lat), atol=1e-5, rtol=1e-5)
    )
    if bool(ok):
        print("KERNEL_OK")
    else:
        raise SystemExit("mismatch vs reference")
</pallas_src>

<mosaic_0001>
module attributes {stable_mosaic.version = 11 : i64} {
  func.func @_pixel_norm_sublane_reduce_kernel(%arg0: i32, %arg1: i32, %arg2: memref<1x4x256xf32, #tpu.memory_space<vmem>>, %arg3: memref<1x4x256xf32, #tpu.memory_space<vmem>>) attributes {dimension_semantics = [#tpu.dimension_semantics<parallel>, #tpu.dimension_semantics<parallel>], iteration_bounds = array<i64: 2, 1>, scalar_prefetch = 0 : i64, scratch_operands = 0 : i64, tpu.core_type = #tpu.core_type<tc>, window_params = [{transform_indices = @transform_0, window_bounds = array<i64: 1, 4, 256>}, {transform_indices = @transform_1, window_bounds = array<i64: 1, 4, 256>}]} {
    %c0 = arith.constant 0 : index
    %c0_0 = arith.constant 0 : index
    %c0_1 = arith.constant 0 : index
    %0 = vector.load %arg2[%c0, %c0_0, %c0_1] : memref<1x4x256xf32, #tpu.memory_space<vmem>>, vector<1x4x256xf32>
    %1 = arith.mulf %0, %0 : vector<1x4x256xf32>
    %cst = arith.constant dense<0.000000e+00> : vector<1x256xf32>
    %2 = vector.multi_reduction <add>, %1, %cst [1] : vector<1x4x256xf32> to vector<1x256xf32>
    %3 = vector.shape_cast %2 : vector<1x256xf32> to vector<1x1x256xf32>
    %cst_2 = arith.constant 4.000000e+00 : f32
    %4 = vector.broadcast %cst_2 : f32 to vector<1x1x256xf32>
    %5 = arith.divf %3, %4 : vector<1x1x256xf32>
    %cst_3 = arith.constant 9.99999993E-9 : f32
    %6 = vector.broadcast %cst_3 : f32 to vector<1x1x256xf32>
    %7 = arith.addf %5, %6 : vector<1x1x256xf32>
    %8 = math.rsqrt %7 : vector<1x1x256xf32>
    %9 = vector.broadcast %8 : vector<1x1x256xf32> to vector<1x4x256xf32>
    %10 = arith.mulf %0, %9 : vector<1x4x256xf32>
    %c0_4 = arith.constant 0 : index
    %c0_5 = arith.constant 0 : index
    %c0_6 = arith.constant 0 : index
    %11 = vector.load %arg3[%c0_4, %c0_5, %c0_6] : memref<1x4x256xf32, #tpu.memory_space<vmem>>, vector<1x4x256xf32>
    tpu.vector_store %arg3[%c0_4, %c0_5, %c0_6], %10 {strides = array<i32>} : memref<1x4x256xf32, #tpu.memory_space<vmem>>, vector<1x4x256xf32>,
    return
  }
  func.func @transform_0(%arg0: i32, %arg1: i32) -> (i32, i32, i32) {
    %c0_i32 = arith.constant 0 : i32
    %c0_i32_0 = arith.constant 0 : i32
    return %arg0, %c0_i32, %arg1 : i32, i32, i32
  }
  func.func @transform_1(%arg0: i32, %arg1: i32) -> (i32, i32, i32) {
    %c0_i32 = arith.constant 0 : i32
    %c0_i32_0 = arith.constant 0 : i32
    return %arg0, %c0_i32, %arg1 : i32, i32, i32
  }
}

</mosaic_0001>

<llo_original>
// kernel: pixen_norm.1
$region0: #{pixen_norm.1}
  #allocation0 [shape = 'u32[]', space=smem, size = 0x4, offset = 0x4, fixed_abs, tag = 'smem constant byte address 0x4 - core index']
  #allocation1 [shape = 'u32[144,128]{1,0:T(1,128)}', space=vmem, size = 0x12000, scoped, tag = 'internal scratch']
  %s0 = inlined_call_operand.vmem [shape: f32[2,4,256], index: 0, kind: input, shape index: {}]
  %s1 = inlined_call_operand.vmem [shape: f32[2,4,256], index: 1, kind: output, shape index: {}]
  %s2 = sld [smem:[#allocation0]]
  $region37: #{pixen_norm.1} parent=0
    _
  %s4 = ssub.s32 1, %s2
  %s5 = scalar_select 0, %s4, %s2
  loop: start=0, step=1, limit=4
  $region2: #{pixen_norm.1} parent=0 // loop_pre_header
    _
  $region3: #{pixen_norm.1} parent=0 // loop_header
    %s7 = sphi 0, %s11
    %p8 = scmp.ge.s32.totalorder %s7, 4
    %s14 = sphi 0, %s26
    %s15 = sphi 0, %s22
    %s16 = sphi 0, %s14
    %s17 = sphi 0, %s15
    %s18 = sphi 0, %s16
    %s19 = sphi 0, %s17
    %s31 = sphi 0, %s33
    %s34 = sphi 0, %s31
    %s35 = sphi 0, %s34
    %s51 = sphi 0, %s35
    %s59 = sphi 0, %s61
    %s62 = sphi 0, %s59
    %s63 = sphi 0, %s62
    %s79 = sphi 0, %s63
  $region4: #{pixen_norm.1} parent=0 // loop_header_branch
    %10 = sbr.rel (%p8) target = $region8
  $region5: #{pixen_norm.1} parent=0 // loop_body
    %s12 = ssub.s32 %s7, 1
    %s13 = ssub.s32 %s7, 2
    %s20 = sadd.s32 1, %s15
    %p21 = scmp.ge.s32.totalorder %s20, 1
    %s22 = scalar_select %p21, 0, %s20
    %s23 = sadd.s32 1, %s14
    %s24 = scalar_select %p21, %s23, %s14
    %p25 = scmp.ge.s32.totalorder %s24, 2
    %s26 = scalar_select %p25, 0, %s24
    %s27 = ssub.s32 %s14, %s26
    %s28 = ssub.s32 %s15, %s22
    %s29 = sor.u32 %s27, %s28
    %p30 = scmp.eq.s32.totalorder %s29, 0
    %s32 = sadd.s32 %s31, 1
    %s33 = scalar_select %p30, %s31, %s32
    %p36 = pneg %p30
    %p37 = scmp.eq.s32.totalorder %s7, 1
    %p38 = por %p36, %p37
    %p39 = scmp.ne.s32.totalorder %s31, %s34
    %p40 = scmp.eq.s32.totalorder %s7, 0
    %p41 = por %p39, %p40
    %p42 = scmp.ne.s32.totalorder %s31, %s34
    %p43 = scmp.eq.s32.totalorder %s12, 1
    %p44 = por %p42, %p43
    %p45 = scmp.ne.s32.totalorder %s34, %s35
    %p46 = scmp.eq.s32.totalorder %s12, 0
    %p47 = por %p45, %p46
    %p48 = scmp.ne.s32.totalorder %s34, %s35
    %p49 = scmp.eq.s32.totalorder %s13, 1
    %p50 = por %p48, %p49
    %p52 = scmp.ne.s32.totalorder %s35, %s51
    %p53 = scmp.eq.s32.totalorder %s13, 0
    %p54 = por %p52, %p53
    %s55 = ssub.s32 %s14, %s26
    %s56 = ssub.s32 %s15, %s22
    %s57 = sor.u32 %s55, %s56
    %p58 = scmp.eq.s32.totalorder %s57, 0
    %s60 = sadd.s32 %s59, 1
    %s61 = scalar_select %p58, %s59, %s60
    %p64 = pneg %p58
    %p65 = scmp.eq.s32.totalorder %s7, 1
    %p66 = por %p64, %p65
    %p67 = scmp.ne.s32.totalorder %s59, %s62
    %p68 = scmp.eq.s32.totalorder %s7, 0
    %p69 = por %p67, %p68
    %p70 = scmp.ne.s32.totalorder %s59, %s62
    %p71 = scmp.eq.s32.totalorder %s12, 1
    %p72 = por %p70, %p71
    %p73 = scmp.ne.s32.totalorder %s62, %s63
    %p74 = scmp.eq.s32.totalorder %s12, 0
    %p75 = por %p73, %p74
    %p76 = scmp.ne.s32.totalorder %s62, %s63
    %p77 = scmp.eq.s32.totalorder %s13, 1
    %p78 = por %p76, %p77
    %p80 = scmp.ne.s32.totalorder %s63, %s79
    %p81 = scmp.eq.s32.totalorder %s13, 0
    %p82 = por %p80, %p81
    %p83 = scmp.le.s32.totalorder 1, %s7
    %p84 = scmp.lt.s32.totalorder %s7, 3
    %p85 = pnand %p83, %p84
    %p86 = pneg %p85
    // Predicated region
    $region9: #{pixen_norm.1} parent=5 // pred_check
      _
    $region10: #{pixen_norm.1} parent=5 // pred_check_branch
      %88 = sbr.rel (%p85) target = $region12
    $region11: #{pixen_norm.1} parent=5 // pred_region
      %s89 = ssub.s32 %s7, 1
    $region12: #{pixen_norm.1} parent=5 // pred_fallthru
      _
    %p90 = scmp.lt.s32.totalorder %s7, 2
    // Predicated region
    $region13: #{pixen_norm.1} parent=5 // pred_check
      %p91 = pneg %p90
    $region14: #{pixen_norm.1} parent=5 // pred_check_branch
      %93 = sbr.rel (%p91) target = $region16
    $region15: #{pixen_norm.1} parent=5 // pred_region
      // Predicated region
      $region17: #{pixen_norm.1} parent=15 // pred_check
        %p94 = pneg %p41
      $region18: #{pixen_norm.1} parent=15 // pred_check_branch
        %96 = sbr.rel (%p94) target = $region20
      $region19: #{pixen_norm.1} parent=15 // pred_region
        %s97 = smul.u32 2, %s15
        %p98 = scmp.lt.s32.totalorder %s14, 1
        %s99 = scalar_select %p98, %s14, 1
        %p100 = scmp.lt.s32.totalorder %s97, 1
        %s101 = scalar_select %p100, %s97, 1
        %s102 = smul.addr %s99, 2
        %s103 = sadd.s32 %s101, %s102
        %s104 = smul.addr %s103, 4
        %s105 = scalar_lea.vmem %s0, %s104
        %s106 = smul.u32 2, %s15
      $region20: #{pixen_norm.1} parent=15 // pred_fallthru
        _
    $region16: #{pixen_norm.1} parent=5 // pred_fallthru
      _
    %p107 = scmp.le.s32.totalorder 1, %s7
    %p108 = scmp.lt.s32.totalorder %s7, 3
    %p109 = pnand %p107, %p108
    %p110 = pneg %p109
    // Predicated region
    $region21: #{pixen_norm.1} parent=5 // pred_check
      _
    $region22: #{pixen_norm.1} parent=5 // pred_check_branch
      %112 = sbr.rel (%p109) target = $region24
    $region23: #{pixen_norm.1} parent=5 // pred_region
      %s113 = ssub.s32 %s7, 1
      %s114 = smul.u32 2, %s17
      %p115 = scmp.lt.s32.totalorder %s16, 1
      %s116 = scalar_select %p115, %s16, 1
      %p117 = scmp.lt.s32.totalorder %s114, 1
      %s118 = scalar_select %p117, %s114, 1
      %s119 = smul.addr %s116, 2
      %s120 = sadd.s32 %s118, %s119
      %s121 = smul.addr %s120, 4
      %s122 = scalar_lea.vmem %s0, %s121
      %p123 = pneg %p47
      %p124 = pneg %p44
      %p125 = pneg %p75
      %p126 = pneg %p72
      %s127 = smul.u32 2, %s17
      %p128 = scmp.lt.s32.totalorder %s16, 1
      %s129 = scalar_select %p128, %s16, 1
      %p130 = scmp.lt.s32.totalorder %s127, 1
      %s131 = scalar_select %p130, %s127, 1
      %s132 = smul.addr %s129, 2
      %s133 = sadd.s32 %s131, %s132
      %s134 = smul.addr %s133, 4
      %s135 = scalar_lea.vmem %s1, %s134
      %s136 = smul.u32 2, %s17
      %p137 = scmp.lt.s32.totalorder %s16, 1
      %s138 = scalar_select %p137, %s16, 1
      %p139 = scmp.lt.s32.totalorder %s136, 1
      %s140 = scalar_select %p139, %s136, 1
      %s141 = smul.addr %s138, 2
      %s142 = sadd.s32 %s140, %s141
      %s143 = smul.addr %s142, 4
      %s144 = scalar_lea.vmem %s0, %s143
      %s145 = smul.u32 2, %s17
      %s146 = smul.u32 2, %s17
      %p147 = scmp.lt.s32.totalorder %s16, 1
      %s148 = scalar_select %p147, %s16, 1
      %p149 = scmp.lt.s32.totalorder %s146, 1
      %s150 = scalar_select %p149, %s146, 1
      %s151 = smul.addr %s148, 2
      %s152 = sadd.s32 %s150, %s151
      %s153 = smul.addr %s152, 4
      %s154 = scalar_lea.vmem %s1, %s153
      %s155 = smul.u32 2, %s17
      %v156 = vld [vmem:[%s144] sm:$0xff]
      %v157 = vmul.f32 %v156, %v156
      %v159 = vcombine.high %v157, %v157
      %vm161 = vcmask 1043456
      %v162 = vsel %vm161, %v157, 0.0
      %v163 = vrot.slane %v162, 4
      %v164 = vadd.f32 %v162, %v163
      %v165 = vrot.slane %v164, 2
      %v166 = vadd.f32 %v164, %v165
      %v167 = vrot.slane %v166, 1
      %v168 = vadd.f32 %v166, %v167
      %v169 = vsel %vm161, %v159, 0.0
      %v170 = vrot.slane %v169, 4
      %v171 = vadd.f32 %v169, %v170
      %v172 = vrot.slane %v171, 2
      %v173 = vadd.f32 %v171, %v172
      %v174 = vrot.slane %v173, 1
      %v175 = vadd.f32 %v173, %v174
      %v176 = vrcp.pop 4.0
      %v177 = vmul.f32 %v168, %v176
      %v178 = vmul.f32 %v175, %v176
      %v179 = vadd.f32 %v177, 1e-08
      %v180 = vadd.f32 %v178, 1e-08
      %v181 = vrsqrt.pop %v179
      %v182 = vrsqrt.pop %v180
      %v185 = vcombine.low %v181, %v182
      %v187 = vmul.f32 %v156, %v185
      %188 = vst [vmem:[%s154] sm:$0xff] %v187
      %s189 = smul.u32 2, %s17
      %p190 = scmp.lt.s32.totalorder %s16, 1
      %s191 = scalar_select %p190, %s16, 1
      %p192 = scmp.lt.s32.totalorder %s189, 1
      %s193 = scalar_select %p192, %s189, 1
      %s194 = smul.addr %s191, 2
      %s195 = sadd.s32 %s193, %s194
      %s196 = smul.addr %s195, 4
      %s197 = scalar_lea.vmem %s1, %s196
      // Predicated region
      $region25: #{pixen_norm.1} parent=23 // pred_check
        %p198 = pneg %p72
      $region26: #{pixen_norm.1} parent=23 // pred_check_branch
        %200 = sbr.rel (%p198) target = $region28
      $region27: #{pixen_norm.1} parent=23 // pred_region
        %s201 = smul.u32 2, %s17
      $region28: #{pixen_norm.1} parent=23 // pred_fallthru
        _
    $region24: #{pixen_norm.1} parent=5 // pred_fallthru
      _
    %p202 = scmp.le.s32.totalorder 2, %s7
    // Predicated region
    $region29: #{pixen_norm.1} parent=5 // pred_check
      %p203 = pneg %p202
    $region30: #{pixen_norm.1} parent=5 // pred_check_branch
      %205 = sbr.rel (%p203) target = $region32
    $region31: #{pixen_norm.1} parent=5 // pred_region
      %s206 = ssub.s32 %s7, 2
      // Predicated region
      $region33: #{pixen_norm.1} parent=31 // pred_check
        %p207 = pneg %p78
      $region34: #{pixen_norm.1} parent=31 // pred_check_branch
        %209 = sbr.rel (%p207) target = $region36
      $region35: #{pixen_norm.1} parent=31 // pred_region
        %s210 = smul.u32 2, %s19
        %p211 = scmp.lt.s32.totalorder %s18, 1
        %s212 = scalar_select %p211, %s18, 1
        %p213 = scmp.lt.s32.totalorder %s210, 1
        %s214 = scalar_select %p213, %s210, 1
        %s215 = smul.addr %s212, 2
        %s216 = sadd.s32 %s214, %s215
        %s217 = smul.addr %s216, 4
        %s218 = scalar_lea.vmem %s1, %s217
      $region36: #{pixen_norm.1} parent=31 // pred_fallthru
        _
    $region32: #{pixen_norm.1} parent=5 // pred_fallthru
      _
  $region6: #{pixen_norm.1} parent=0 // loop_footer
    %s11 = sadd.s32 1, %s7
  $region7: #{pixen_norm.1} parent=0 // loop_footer_branch
    %6 = sbr.rel target = $region3
  $region8: #{pixen_norm.1} parent=0 // loop_exit
    _

</llo_original>
